<compile_context>
chip_gen: v7x
topology: tpu7x:2x2x1
jax: 0.10.0
libtpu: 0.0.40
codegen_flags: <defaults>
</compile_context>

<pallas_src>
import jax
import jax.numpy as jnp
from jax.experimental import pallas as pl
from jax.experimental.pallas import tpu as pltpu


def _choose_nb(n, per_sample_bytes,
               target_block_bytes=4 << 20,   # ~86% of HBM roofline in tile sweeps
               min_block_bytes=1 << 20,      # never shrink below this for grid length
               max_block_bytes=10 << 20):    # keeps 4x block (dbl-buffered io) < 48 MiB
    """Batch rows per block: big blocks first, grid>=4 only if it stays >= 1 MiB."""
    per = max(1, per_sample_bytes)
    nb = max(1, min(n, target_block_bytes // per))
    nb = max(1, min(nb, max_block_bytes // per))
    # TODO(synk): if a single sample exceeds ~10 MiB, spatial (HW) tiling with a
    # two-pass mean would be needed; not required for siamfcpp-scale shapes.
    if pl.cdiv(n, nb) < 4:
        nb_g4 = max(1, pl.cdiv(n, 4))
        if nb_g4 * per >= min_block_bytes:
            nb = min(nb, nb_g4)
    return nb


def adaptive_weight(x, w_fc1, w_fc2, block_batch=None):
    """x: (N, C, H, W); w_fc1: (C//4, C); w_fc2: (1, C//4).  No biases."""
    N, C, H, W = x.shape
    C4 = w_fc1.shape[0]
    HW = H * W

    x_flat = x.reshape(N, C, HW)            # contiguous: free metadata reshape
    w1_t = w_fc1.T                          # (C, C4): avoid in-kernel transpose
    inv_hw = 1.0 / float(HW)                # divide by TRUE spatial size

    itemsize = jnp.dtype(x.dtype).itemsize
    per_sample_bytes = C * HW * itemsize
    NB = block_batch if block_batch is not None else _choose_nb(N, per_sample_bytes)
    NB = max(1, min(NB, N))
    grid = pl.cdiv(N, NB)

    block_bytes = NB * per_sample_bytes
    weight_bytes = (C * C4 + C4) * 4
    # double-buffered input + output blocks + weights + margin; 32 MiB floor,
    # 48 MiB ceiling (v7x has 64 MiB physical VMEM per TensorCore).
    vmem_limit = int(min(48 << 20, max(32 << 20,
                                       4 * block_bytes + 4 * weight_bytes + (1 << 20))))

    def kernel(x_ref, w1t_ref, w2_ref, o_ref):
        # ---- pass 1: per-channel spatial mean (f32 accumulation) -------------
        x_sum = jnp.sum(x_ref[...].astype(jnp.float32), axis=-1)        # (NB, C)
        x_avg = x_sum * inv_hw                                          # (NB, C)

        # ---- fc1 (1x1 conv, no bias) + relu : tiny batched matmul ------------
        h = jnp.dot(x_avg, w1t_ref[...],
                    preferred_element_type=jnp.float32)                 # (NB, C4)
        h = jnp.maximum(h, 0.0)

        # ---- fc2 (1x1 conv, no bias) + relu : VPU mul + lane reduce ----------
        logit = jnp.sum(h * w2_ref[...], axis=-1, keepdims=True)        # (NB, 1)
        logit = jnp.maximum(logit, 0.0)

        # ---- sigmoid -> per-sample scalar weight -----------------------------
        s = 1.0 / (1.0 + jnp.exp(-logit))                               # (NB, 1) f32

        # ---- pass 2: broadcast multiply in the NATIVE dtype ------------------
        o_ref[...] = x_ref[...] * s[:, :, None].astype(o_ref.dtype)

    out_flat = pl.pallas_call(
        kernel,
        out_shape=jax.ShapeDtypeStruct((N, C, HW), x.dtype),
        grid_spec=pltpu.PrefetchScalarGridSpec(
            num_scalar_prefetch=0,
            grid=(grid,),
            in_specs=[
                # last two dims equal the full array extents -> (8,128) rule OK,
                # no padding, no post-slice.
                pl.BlockSpec((NB, C, HW), lambda i: (i, 0, 0)),
                pl.BlockSpec((C, C4), lambda i: (0, 0)),
                pl.BlockSpec((1, C4), lambda i: (0, 0)),
            ],
            out_specs=pl.BlockSpec((NB, C, HW), lambda i: (i, 0, 0)),
        ),
        compiler_params=pltpu.CompilerParams(
            dimension_semantics=("parallel",),
            vmem_limit_bytes=vmem_limit),
    )(x_flat, w1_t, w_fc2)

    return out_flat.reshape(N, C, H, W)


def _reference(x, w_fc1, w_fc2):
    # Pure-JAX reference of the PyTorch forward.
    x_avg = jnp.mean(x, axis=(2, 3))                         # (N, C)
    h = jnp.maximum(x_avg @ w_fc1.T, 0.0)                    # (N, C//4)
    w = jnp.maximum(h @ w_fc2.T, 0.0)                        # (N, 1)
    s = jax.nn.sigmoid(w)                                    # (N, 1)
    return x * s[:, :, None, None]


def _run_case(key, N, C, H, W, block_batch=None):
    kx, k1, k2 = jax.random.split(key, 3)
    x = jax.random.normal(kx, (N, C, H, W), dtype=jnp.float32)
    w_fc1 = jax.random.normal(k1, (C // 4, C), dtype=jnp.float32) * 0.1
    w_fc2 = jax.random.normal(k2, (1, C // 4), dtype=jnp.float32) * 0.1

    out = adaptive_weight(x, w_fc1, w_fc2, block_batch=block_batch)
    out = jax.block_until_ready(out)

    ref = _reference(x, w_fc1, w_fc2)
    assert out.shape == (N, C, H, W)
    assert jnp.allclose(out, ref, atol=1e-5, rtol=1e-5), \
        f"mismatch vs reference for shape {(N, C, H, W)} (block_batch={block_batch})"


if __name__ == "__main__":
    key = jax.random.PRNGKey(0)
    k0, k1, k2 = jax.random.split(key, 3)

    # Case 1: small, lane-aligned spatial size (HW = 256).
    _run_case(k0, N=2, C=16, H=16, W=16)

    # Case 2: siamfcpp-like spatial size 17x17 (HW = 289), exercises the
    # non-multiple-of-128 last dim (masked lane tail) without any padding.
    _run_case(k1, N=4, C=16, H=17, W=17)

    # Case 3: N not divisible by the batch block -> cdiv grid with a partial
    # last block (tail rows' stores are dropped by Pallas).
    _run_case(k2, N=5, C=16, H=17, W=17, block_batch=2)

    print("KERNEL_OK")
</pallas_src>

<mosaic_0001>
module attributes {stable_mosaic.version = 11 : i64} {
  func.func @kernel(%arg0: i32, %arg1: memref<2x16x256xf32, #tpu.memory_space<vmem>>, %arg2: memref<16x4xf32, #tpu.memory_space<vmem>>, %arg3: memref<1x4xf32, #tpu.memory_space<vmem>>, %arg4: memref<2x16x256xf32, #tpu.memory_space<vmem>>) attributes {dimension_semantics = [#tpu.dimension_semantics<parallel>], iteration_bounds = array<i64: 1>, scalar_prefetch = 0 : i64, scratch_operands = 0 : i64, tpu.core_type = #tpu.core_type<tc>, window_params = [{transform_indices = @transform_0, window_bounds = array<i64: 2, 16, 256>}, {pipeline_mode = #tpu.pipeline_mode<synchronous>, transform_indices = @transform_1, window_bounds = array<i64: 16, 4>}, {pipeline_mode = #tpu.pipeline_mode<synchronous>, transform_indices = @transform_2, window_bounds = array<i64: 1, 4>}, {transform_indices = @transform_3, window_bounds = array<i64: 2, 16, 256>}]} {
    %c0 = arith.constant 0 : index
    %c0_0 = arith.constant 0 : index
    %c0_1 = arith.constant 0 : index
    %0 = vector.load %arg1[%c0, %c0_0, %c0_1] : memref<2x16x256xf32, #tpu.memory_space<vmem>>, vector<2x16x256xf32>
    %cst = arith.constant dense<0.000000e+00> : vector<2x16xf32>
    %1 = vector.multi_reduction <add>, %0, %cst [2] : vector<2x16x256xf32> to vector<2x16xf32>
    %cst_2 = arith.constant 3.906250e-03 : f32
    %2 = vector.broadcast %cst_2 : f32 to vector<2x16xf32>
    %3 = arith.mulf %1, %2 : vector<2x16xf32>
    %c0_3 = arith.constant 0 : index
    %c0_4 = arith.constant 0 : index
    %4 = vector.load %arg2[%c0_3, %c0_4] : memref<16x4xf32, #tpu.memory_space<vmem>>, vector<16x4xf32>
    %cst_5 = arith.constant dense<0.000000e+00> : vector<2x4xf32>
    %5 = tpu.matmul %3, %4, %cst_5 {dimension_numbers = #tpu.dot_dimension_numbers<[1], [0], [0], [1], [0, 0, 1, 1], [], []>} : vector<2x16xf32>, vector<16x4xf32>, vector<2x4xf32> -> vector<2x4xf32>
    %cst_6 = arith.constant 0.000000e+00 : f32
    %6 = vector.broadcast %cst_6 : f32 to vector<2x4xf32>
    %7 = arith.maximumf %5, %6 : vector<2x4xf32>
    %c0_7 = arith.constant 0 : index
    %c0_8 = arith.constant 0 : index
    %8 = vector.load %arg3[%c0_7, %c0_8] : memref<1x4xf32, #tpu.memory_space<vmem>>, vector<1x4xf32>
    %9 = vector.broadcast %8 : vector<1x4xf32> to vector<2x4xf32>
    %10 = arith.mulf %7, %9 : vector<2x4xf32>
    %cst_9 = arith.constant dense<0.000000e+00> : vector<2xf32>
    %11 = vector.multi_reduction <add>, %10, %cst_9 [1] : vector<2x4xf32> to vector<2xf32>
    %12 = vector.shape_cast %11 : vector<2xf32> to vector<2x1xf32>
    %cst_10 = arith.constant 0.000000e+00 : f32
    %13 = vector.broadcast %cst_10 : f32 to vector<2x1xf32>
    %14 = arith.maximumf %12, %13 : vector<2x1xf32>
    %cst_11 = arith.constant 0.000000e+00 : f32
    %15 = vector.broadcast %cst_11 : f32 to vector<2x1xf32>
    %16 = arith.subf %15, %14 : vector<2x1xf32>
    %17 = math.exp %16 : vector<2x1xf32>
    %cst_12 = arith.constant 1.000000e+00 : f32
    %18 = vector.broadcast %cst_12 : f32 to vector<2x1xf32>
    %19 = arith.addf %18, %17 : vector<2x1xf32>
    %cst_13 = arith.constant 1.000000e+00 : f32
    %20 = vector.broadcast %cst_13 : f32 to vector<2x1xf32>
    %21 = arith.divf %20, %19 : vector<2x1xf32>
    %c0_14 = arith.constant 0 : index
    %c0_15 = arith.constant 0 : index
    %c0_16 = arith.constant 0 : index
    %22 = vector.load %arg1[%c0_14, %c0_15, %c0_16] : memref<2x16x256xf32, #tpu.memory_space<vmem>>, vector<2x16x256xf32>
    %23 = vector.shape_cast %21 : vector<2x1xf32> to vector<2x1x1xf32>
    %24 = vector.broadcast %23 : vector<2x1x1xf32> to vector<2x16x256xf32>
    %25 = arith.mulf %22, %24 : vector<2x16x256xf32>
    %c0_17 = arith.constant 0 : index
    %c0_18 = arith.constant 0 : index
    %c0_19 = arith.constant 0 : index
    %26 = vector.load %arg4[%c0_17, %c0_18, %c0_19] : memref<2x16x256xf32, #tpu.memory_space<vmem>>, vector<2x16x256xf32>
    tpu.vector_store %arg4[%c0_17, %c0_18, %c0_19], %25 {strides = array<i32>} : memref<2x16x256xf32, #tpu.memory_space<vmem>>, vector<2x16x256xf32>,
    return
  }
  func.func @transform_0(%arg0: i32) -> (i32, i32, i32) {
    %c0_i32 = arith.constant 0 : i32
    %c0_i32_0 = arith.constant 0 : i32
    %c0_i32_1 = arith.constant 0 : i32
    return %arg0, %c0_i32, %c0_i32_0 : i32, i32, i32
  }
  func.func @transform_1(%arg0: i32) -> (i32, i32) {
    %c0_i32 = arith.constant 0 : i32
    %c0_i32_0 = arith.constant 0 : i32
    %c0_i32_1 = arith.constant 0 : i32
    return %c0_i32, %c0_i32_0 : i32, i32
  }
  func.func @transform_2(%arg0: i32) -> (i32, i32) {
    %c0_i32 = arith.constant 0 : i32
    %c0_i32_0 = arith.constant 0 : i32
    %c0_i32_1 = arith.constant 0 : i32
    return %c0_i32, %c0_i32_0 : i32, i32
  }
  func.func @transform_3(%arg0: i32) -> (i32, i32, i32) {
    %c0_i32 = arith.constant 0 : i32
    %c0_i32_0 = arith.constant 0 : i32
    %c0_i32_1 = arith.constant 0 : i32
    return %arg0, %c0_i32, %c0_i32_0 : i32, i32, i32
  }
}

</mosaic_0001>

<llo_original>
// kernel: tpu_custom_call.1
$region0: #{tpu_custom_call.1}
  #allocation0 [shape = 'u32[]', space=smem, size = 0x4, offset = 0x4, fixed_abs, tag = 'smem constant byte address 0x4 - core index']
  #allocation1 [shape = 'u32[144,128]{1,0:T(1,128)}', space=vmem, size = 0x12000, scoped, tag = 'internal scratch']
  %s0 = inlined_call_operand.hbm [shape: f32[2,16,256], index: 0, kind: input, shape index: {}]
  %s1 = inlined_call_operand.vmem [shape: f32[16,4], index: 1, kind: input, shape index: {}]
  %s2 = inlined_call_operand.vmem [shape: f32[1,4], index: 2, kind: input, shape index: {}]
  %s3 = inlined_call_operand.hbm [shape: f32[2,16,256], index: 3, kind: output, shape index: {}]
  %s4 = sld [smem:[#allocation0]]
  $region26: #{tpu_custom_call.1} parent=0
    _
  %s6 = ssub.s32 1, %s4
  %s7 = scalar_select 0, %s6, %s4
  $region1: #{tpu_custom_call.1} parent=0
    #allocation2 [shape = 'u8[32768]{0}', space=vmem, size = 0x8000, scoped, tag = 'input window, operand 0, single buffered']
    #allocation3 [shape = 's32[1]{0}', space=sflag, size = 0x4, scoped, tag = 'scoped memory for tpu_custom_call.1']
    #allocation4 [shape = 's32[1]{0}', space=sflag, size = 0x4, scoped, tag = 'scoped memory for tpu_custom_call.1']
    #allocation5 [shape = 'u8[32768]{0}', space=vmem, size = 0x8000, scoped, tag = 'output window, operand 0, single buffered']
    %8 = vsyncpa [#allocation3], 0
    %9 = vsyncpa [#allocation4], 0
    // Predicated region
    $region2: #{tpu_custom_call.1} parent=1 // pred_check
      _
    $region3: #{tpu_custom_call.1} parent=1 // pred_check_branch
      %11 = sbr.rel (0) target = $region5
    $region4: #{tpu_custom_call.1} parent=1 // pred_region
      %s13 = ssub.s32 1024, 1024
      %14 = vsyncadd [#allocation3], %s13
      %s15 = sshll.u32 [#allocation2], 4
      %s16 = int_to_ptr.vmem [resolvable:$true] %s15
      %21 = dma.hbm_to_vmem [thread:$0]  %s0, 1024, %s16, [#allocation3], 256, 256, 16
    $region5: #{tpu_custom_call.1} parent=1 // pred_fallthru
      _
    // Predicated region
    $region6: #{tpu_custom_call.1} parent=1 // pred_check
      _
    $region7: #{tpu_custom_call.1} parent=1 // pred_check_branch
      %23 = sbr.rel (0) target = $region9
    $region8: #{tpu_custom_call.1} parent=1 // pred_region
      _
    $region9: #{tpu_custom_call.1} parent=1 // pred_fallthru
      _
    // Predicated region
    $region10: #{tpu_custom_call.1} parent=1 // pred_check
      _
    $region11: #{tpu_custom_call.1} parent=1 // pred_check_branch
      %25 = sbr.rel (0) target = $region13
    $region12: #{tpu_custom_call.1} parent=1 // pred_region
      _
    $region13: #{tpu_custom_call.1} parent=1 // pred_fallthru
      _
    // Predicated region
    $region14: #{tpu_custom_call.1} parent=1 // pred_check
      _
    $region15: #{tpu_custom_call.1} parent=1 // pred_check_branch
      %27 = sbr.rel (0) target = $region17
    $region16: #{tpu_custom_call.1} parent=1 // pred_region
      %28 = dma.done [#allocation3], 1024
    $region17: #{tpu_custom_call.1} parent=1 // pred_fallthru
      _
    %v29 = vld [vmem:[#allocation2] sm:$0xff]
    %v30 = vld [vmem:[#allocation2 + $0x8] sm:$0xff]
    %v31 = vld [vmem:[#allocation2 + $0x10] sm:$0xff]
    %v32 = vld [vmem:[#allocation2 + $0x18] sm:$0xff]
    %v33 = vld [vmem:[#allocation2 + $0x20] sm:$0xff]
    %v34 = vld [vmem:[#allocation2 + $0x28] sm:$0xff]
    %v35 = vld [vmem:[#allocation2 + $0x30] sm:$0xff]
    %v36 = vld [vmem:[#allocation2 + $0x38] sm:$0xff]
    %v37 = vadd.f32 %v29, %v30
    %38 = vadd.xlane.f32.xlu0 %v37
    %v39 = vpop.xlane.xlu0 %38
    %v40 = vadd.f32 %v31, %v32
    %41 = vadd.xlane.f32.xlu0 %v40
    %v42 = vpop.xlane.xlu0 %41
    %v43 = vadd.f32 %v33, %v34
    %44 = vadd.xlane.f32.xlu0 %v43
    %v45 = vpop.xlane.xlu0 %44
    %v46 = vadd.f32 %v35, %v36
    %47 = vadd.xlane.f32.xlu0 %v46
    %v48 = vpop.xlane.xlu0 %47
    %v49 = vmul.f32 %v39, 0.00390625
    %v50 = vmul.f32 %v42, 0.00390625
    %v51 = vmul.f32 %v45, 0.00390625
    %v52 = vmul.f32 %v48, 0.00390625
    %v53 = vld [vmem:[%s1] sm:$0xff]
    %v54 = vld [vmem:[%s1 + $0x8] sm:$0xff]
    %v59 = vlaneseq
    %v60 = vand.u32 %v59, 127
    %v61 = vlaneseq
    %v62 = vshrl.u32 %v61, 7
    %v63 = vsub.s32 %v60, %v62
    %v64 = vrot.slane %v49, %v63
    %v65 = vadd.s32 %v60, 4294967288
    %v66 = vlaneseq
    %v67 = vshrl.u32 %v66, 7
    %v68 = vsub.s32 %v65, %v67
    %v69 = vrot.slane %v50, %v68
    %vm70 = vcmask 130112
    %v71 = vsel %vm70, %v69, %v64
    %v72 = vlaneseq
    %v73 = vshrl.u32 %v72, 7
    %v74 = vsub.s32 %v60, %v73
    %v75 = vrot.slane %v51, %v74
    %v76 = vlaneseq
    %v77 = vshrl.u32 %v76, 7
    %v78 = vsub.s32 %v65, %v77
    %v79 = vrot.slane %v52, %v78
    %v80 = vsel %vm70, %v79, %v75
    %vm81 = vcmask 1041409
    %v82 = vsel %vm81, %v80, %v71
    %vm83 = vcmask 130048
    %v84 = vsel %vm83, %v82, 0
    %86 = vmatprep.subr.mxu0 0.0
    %87 = vmatpush1.msra.mxu0 %v53
    %88 = vmatprep.subr.mxu0 0.0
    %89 = vmatpush1.msra.mxu0 %v54
    %90 = vmatprep.subr.mxu0 0.0
    %91 = vmatpush1.msra.mxu0 0.0
    %92 = vmatprep.subr.mxu0 0.0
    %93 = vmatpush1.msra.mxu0 0.0
    %94 = vmatprep.subr.mxu0 0.0
    %95 = vmatpush1.msra.mxu0 0.0
    %96 = vmatprep.subr.mxu0 0.0
    %97 = vmatpush1.msra.mxu0 0.0
    %98 = vmatprep.subr.mxu0 0.0
    %99 = vmatpush1.msra.mxu0 0.0
    %100 = vmatprep.subr.mxu0 0.0
    %101 = vmatpush1.msra.mxu0 0.0
    %102 = vmatprep.subr.mxu0 0.0
    %103 = vmatpush1.msra.mxu0 0.0
    %104 = vmatprep.subr.mxu0 0.0
    %105 = vmatpush1.msra.mxu0 0.0
    %106 = vmatprep.subr.mxu0 0.0
    %107 = vmatpush1.msra.mxu0 0.0
    %108 = vmatprep.subr.mxu0 0.0
    %109 = vmatpush1.msra.mxu0 0.0
    %110 = vmatprep.subr.mxu0 0.0
    %111 = vmatpush1.msra.mxu0 0.0
    %112 = vmatprep.subr.mxu0 0.0
    %113 = vmatpush1.msra.mxu0 0.0
    %114 = vmatprep.subr.mxu0 0.0
    %115 = vmatpush1.msra.mxu0 0.0
    %116 = vmatprep.subr.mxu0 0.0
    %117 = vmatpush1.msra.mxu0 0.0
    %118 = vmatprep.subr.mxu0 0.0
    %119 = vmatpush1.msra.mxu0 0.0
    %120 = vmatprep.subr.mxu0 0.0
    %121 = vmatpush1.msra.mxu0 0.0
    %122 = vmatprep.subr.mxu0 0.0
    %123 = vmatpush1.msra.mxu0 0.0
    %124 = vmatprep.subr.mxu0 0.0
    %125 = vmatpush1.msra.mxu0 0.0
    %126 = vmatprep.subr.mxu0 0.0
    %127 = vmatpush1.msra.mxu0 0.0
    %128 = vmatprep.subr.mxu0 0.0
    %129 = vmatpush1.msra.mxu0 0.0
    %130 = vmatprep.subr.mxu0 0.0
    %131 = vmatpush1.msra.mxu0 0.0
    %132 = vmatprep.subr.mxu0 0.0
    %133 = vmatpush1.msra.mxu0 0.0
    %134 = vmatprep.subr.mxu0 0.0
    %135 = vmatpush1.msra.mxu0 0.0
    %136 = vmatprep.subr.mxu0 0.0
    %137 = vmatpush1.msra.mxu0 0.0
    %138 = vmatprep.subr.mxu0 0.0
    %139 = vmatpush1.msra.mxu0 0.0
    %140 = vmatprep.subr.mxu0 0.0
    %141 = vmatpush1.msra.mxu0 0.0
    %142 = vmatprep.subr.mxu0 0.0
    %143 = vmatpush1.msra.mxu0 0.0
    %144 = vmatprep.subr.mxu0 0.0
    %145 = vmatpush1.msra.mxu0 0.0
    %146 = vmatprep.subr.mxu0 0.0
    %147 = vmatpush1.msra.mxu0 0.0
    %148 = vmatprep.subr.mxu0 0.0
    %149 = vmatpush1.msra.mxu0 0.0
    %150 = vmatprep.mubr.f32.mxu0 0.0
    %151 = vmatmul.mubr.f32.gmra.mrb[0].mxu0 %v84
    %v152 = vpop.f32.mrb[0].mxu0
    %v153 = vadd.f32 0.0, %v152
    %v154 = vpop.f32.mrb[0].mxu0
    %155 = vdwg.mxu0
    %v156 = vmax.f32 %v153, 0.0
    %v157 = vld [vmem:[%s2] sm:$0x1]
    %v159 = vlaneseq
    %v160 = vshrl.u32 %v159, 7
    %v161 = vsub.s32 0, %v160
    %v162 = vrot.slane %v157, %v161
    %v164 = vmul.f32 %v156, %v162
    %vm165 = vcmask 25600
    %v166 = vsel %vm165, %v164, 0.0
    %167 = vadd.xlane.f32.xlu0 %v166
    %v168 = vpop.xlane.xlu0 %167
    %v169 = vmax.f32 %v168, 0.0
    %v170 = vsub.f32 0.0, %v169
    %v171 = vmul.f32 %v170, 1.442695
    %v172 = vpow.pop %v171
    %v173 = vadd.f32 %v172, 1.0
    %v174 = vrcp.pop %v173
    %v175 = vmul.f32 1.0, %v174
    %v177 = vlaneseq
    %v178 = vshrl.u32 %v177, 7
    %v179 = vsub.s32 0, %v178
    %v180 = vrot.slane %v175, %v179
    %v181 = vlaneseq
    %v182 = vshrl.u32 %v181, 7
    %v183 = vsub.s32 1, %v182
    %v184 = vrot.slane %v175, %v183
    %v187 = vmul.f32 %v29, %v180
    %v188 = vmul.f32 %v30, %v180
    %v189 = vmul.f32 %v31, %v180
    %v190 = vmul.f32 %v32, %v180
    %v191 = vmul.f32 %v33, %v184
    %v192 = vmul.f32 %v34, %v184
    %v193 = vmul.f32 %v35, %v184
    %v194 = vmul.f32 %v36, %v184
    %195 = vst [vmem:[#allocation5] sm:$0xff] %v187
    %196 = vst [vmem:[#allocation5 + $0x8] sm:$0xff] %v188
    %197 = vst [vmem:[#allocation5 + $0x10] sm:$0xff] %v189
    %198 = vst [vmem:[#allocation5 + $0x18] sm:$0xff] %v190
    %199 = vst [vmem:[#allocation5 + $0x20] sm:$0xff] %v191
    %200 = vst [vmem:[#allocation5 + $0x28] sm:$0xff] %v192
    %201 = vst [vmem:[#allocation5 + $0x30] sm:$0xff] %v193
    %202 = vst [vmem:[#allocation5 + $0x38] sm:$0xff] %v194
    // Predicated region
    $region18: #{tpu_custom_call.1} parent=1 // pred_check
      _
    $region19: #{tpu_custom_call.1} parent=1 // pred_check_branch
      %204 = sbr.rel (0) target = $region21
    $region20: #{tpu_custom_call.1} parent=1 // pred_region
      %s206 = ssub.s32 1024, 1024
      %207 = vsyncadd [#allocation4], %s206
      %s208 = sshll.u32 [#allocation5], 4
      %s209 = int_to_ptr.vmem [resolvable:$true] %s208
      %214 = dma.vmem_to_hbm [thread:$0]  %s209, 1024, %s3, [#allocation4], 256, 256, 16
    $region21: #{tpu_custom_call.1} parent=1 // pred_fallthru
      _
    // Predicated region
    $region22: #{tpu_custom_call.1} parent=1 // pred_check
      _
    $region23: #{tpu_custom_call.1} parent=1 // pred_check_branch
      %216 = sbr.rel (0) target = $region25
    $region24: #{tpu_custom_call.1} parent=1 // pred_region
      %217 = dma.done [#allocation4], 1024
    $region25: #{tpu_custom_call.1} parent=1 // pred_fallthru
      _
    %218 = vsyncpa [#allocation3], 1
    %219 = vsyncpa [#allocation4], 1

</llo_original>
